<compile_context>
chip_gen: v5e
topology: v5e:2x2
jax: 0.10.0
libtpu: 0.0.40
codegen_flags: <defaults>
</compile_context>

<pallas_src>
import functools

import jax
import jax.numpy as jnp
from jax.experimental import pallas as pl
from jax.experimental.pallas import tpu as pltpu

_LANE = 128      # lane width (last dim granularity)
_SUBLANE = 8     # sublane width (second-to-last dim granularity)


def _round_up(n, m):
    return ((n + m - 1) // m) * m


def _mlp_kernel(x_ref, w1_ref, b1_ref, w2_ref, b2_ref, o_ref):
    # fc1 on the MXU: bf16 operands, f32 accumulation.
    xb = x_ref[...].astype(jnp.bfloat16)
    h = jnp.dot(xb, w1_ref[...], preferred_element_type=jnp.float32)
    # Bias add + ReLU in f32 (VPU-friendly on all generations, incl. v5e).
    h = jnp.maximum(h + b1_ref[...], 0.0)
    # fc_family on the MXU: bf16 operands, f32 accumulation.
    out = jnp.dot(h.astype(jnp.bfloat16), w2_ref[...],
                  preferred_element_type=jnp.float32)
    o_ref[...] = (out + b2_ref[...]).astype(o_ref.dtype)
    # TODO(synk): for very large hidden_dim, additionally tile the hidden/K axis
    # (consume fc1 chunks directly into an fc2 accumulator) instead of
    # materializing the full (TB, hidden) f32 intermediate.


@functools.partial(jax.jit, static_argnames=("block_b",))
def mlp_forward(x, w1_t, b1, w2_t, b2, *, block_b=512):
    """x: [B, input_dim]; w1_t: [input_dim, hidden]; b1: [1, hidden];
    w2_t: [hidden, num_classes]; b2: [1, num_classes] -> [B, num_classes]."""
    batch, input_dim = x.shape
    hidden = w1_t.shape[1]
    num_classes = w2_t.shape[1]

    # Lane-dense zero-padding of hidden / class dims (exactly preserves math).
    hp = _round_up(hidden, _LANE)
    cp = _round_up(num_classes, _LANE)
    # Batch tile: multiple of 8 sublanes, capped at block_b.
    tb = min(block_b, _round_up(batch, _SUBLANE))
    bp = _round_up(batch, tb)

    xp = jnp.pad(x, ((0, bp - batch), (0, 0)))
    w1p = jnp.pad(w1_t, ((0, 0), (0, hp - hidden))).astype(jnp.bfloat16)
    b1p = jnp.pad(b1, ((0, 0), (0, hp - hidden))).astype(jnp.float32)
    w2p = jnp.pad(w2_t, ((0, hp - hidden), (0, cp - num_classes))).astype(jnp.bfloat16)
    b2p = jnp.pad(b2, ((0, 0), (0, cp - num_classes))).astype(jnp.float32)

    grid = (bp // tb,)
    out_padded = pl.pallas_call(
        _mlp_kernel,
        out_shape=jax.ShapeDtypeStruct((bp, cp), x.dtype),
        grid=grid,
        in_specs=[
            # x: tiled over batch.
            pl.BlockSpec((tb, input_dim), lambda i: (i, 0)),
            # Weights / biases: constant block index -> resident in VMEM.
            pl.BlockSpec((input_dim, hp), lambda i: (0, 0)),
            pl.BlockSpec((1, hp), lambda i: (0, 0)),
            pl.BlockSpec((hp, cp), lambda i: (0, 0)),
            pl.BlockSpec((1, cp), lambda i: (0, 0)),
        ],
        out_specs=pl.BlockSpec((tb, cp), lambda i: (i, 0)),
        compiler_params=pltpu.CompilerParams(
            dimension_semantics=("parallel",),
        ),
    )(xp, w1p, b1p, w2p, b2p)
    return out_padded[:batch, :num_classes]


def init_mlp_params(key, input_dim, hidden_dim, num_family_classes,
                    dtype=jnp.float32):
    """Deterministic init mirroring nn.Linear's default U(-1/sqrt(fan_in), +).
    Weights are stored already transposed to [in, out] for the kernel."""
    k1, k2, k3, k4 = jax.random.split(key, 4)
    bound1 = 1.0 / jnp.sqrt(jnp.array(input_dim, dtype))
    bound2 = 1.0 / jnp.sqrt(jnp.array(hidden_dim, dtype))
    w1_t = jax.random.uniform(k1, (input_dim, hidden_dim), dtype,
                              minval=-bound1, maxval=bound1)
    b1 = jax.random.uniform(k2, (1, hidden_dim), dtype,
                            minval=-bound1, maxval=bound1)
    w2_t = jax.random.uniform(k3, (hidden_dim, num_family_classes), dtype,
                              minval=-bound2, maxval=bound2)
    b2 = jax.random.uniform(k4, (1, num_family_classes), dtype,
                            minval=-bound2, maxval=bound2)
    return w1_t, b1, w2_t, b2


if __name__ == "__main__":
    input_dim = 32
    hidden_dim = 64
    num_family_classes = 8
    batch = 16

    key = jax.random.PRNGKey(0)
    k_x, k_p = jax.random.split(key)
    x = jax.random.normal(k_x, (batch, input_dim), jnp.float32)
    w1_t, b1, w2_t, b2 = init_mlp_params(k_p, input_dim, hidden_dim,
                                         num_family_classes)

    # block_b=8 -> 2 grid steps at batch=16, exercising the batch pipeline.
    out = mlp_forward(x, w1_t, b1, w2_t, b2, block_b=8)
    out = jax.block_until_ready(out)
    assert out.shape == (batch, num_family_classes)

    # Reference with matched bf16 matmul operands (tight check).
    xb = x.astype(jnp.bfloat16)
    hb = jnp.maximum(
        jnp.dot(xb, w1_t.astype(jnp.bfloat16),
                preferred_element_type=jnp.float32) + b1, 0.0)
    ref_bf16 = jnp.dot(hb.astype(jnp.bfloat16), w2_t.astype(jnp.bfloat16),
                       preferred_element_type=jnp.float32) + b2
    assert jnp.allclose(out, ref_bf16, atol=1e-2, rtol=1e-2)

    # Full-f32 reference (loose check: bounds the bf16 quantization error).
    ref_f32 = jnp.maximum(x @ w1_t + b1, 0.0) @ w2_t + b2
    assert jnp.allclose(out, ref_f32, atol=5e-2, rtol=5e-2)

    print("KERNEL_OK")
</pallas_src>

<mosaic_0001>
module attributes {stable_mosaic.version = 11 : i64} {
  func.func @_mlp_kernel(%arg0: i32, %arg1: memref<8x32xf32, #tpu.memory_space<vmem>>, %arg2: memref<32x128xbf16, #tpu.memory_space<vmem>>, %arg3: memref<1x128xf32, #tpu.memory_space<vmem>>, %arg4: memref<128x128xbf16, #tpu.memory_space<vmem>>, %arg5: memref<1x128xf32, #tpu.memory_space<vmem>>, %arg6: memref<8x128xf32, #tpu.memory_space<vmem>>) attributes {dimension_semantics = [#tpu.dimension_semantics<parallel>], iteration_bounds = array<i64: 2>, scalar_prefetch = 0 : i64, scratch_operands = 0 : i64, tpu.core_type = #tpu.core_type<tc>, window_params = [{transform_indices = @transform_0, window_bounds = array<i64: 8, 32>}, {pipeline_mode = #tpu.pipeline_mode<synchronous>, transform_indices = @transform_1, window_bounds = array<i64: 32, 128>}, {pipeline_mode = #tpu.pipeline_mode<synchronous>, transform_indices = @transform_2, window_bounds = array<i64: 1, 128>}, {pipeline_mode = #tpu.pipeline_mode<synchronous>, transform_indices = @transform_3, window_bounds = array<i64: 128, 128>}, {pipeline_mode = #tpu.pipeline_mode<synchronous>, transform_indices = @transform_4, window_bounds = array<i64: 1, 128>}, {transform_indices = @transform_5, window_bounds = array<i64: 8, 128>}]} {
    %c0 = arith.constant 0 : index
    %c0_0 = arith.constant 0 : index
    %0 = vector.load %arg1[%c0, %c0_0] : memref<8x32xf32, #tpu.memory_space<vmem>>, vector<8x32xf32>
    %1 = arith.truncf %0 : vector<8x32xf32> to vector<8x32xbf16>
    %c0_1 = arith.constant 0 : index
    %c0_2 = arith.constant 0 : index
    %2 = vector.load %arg2[%c0_1, %c0_2] : memref<32x128xbf16, #tpu.memory_space<vmem>>, vector<32x128xbf16>
    %cst = arith.constant dense<0.000000e+00> : vector<8x128xf32>
    %3 = tpu.matmul %1, %2, %cst {dimension_numbers = #tpu.dot_dimension_numbers<[1], [0], [0], [1], [0, 0, 1, 1], [], []>} : vector<8x32xbf16>, vector<32x128xbf16>, vector<8x128xf32> -> vector<8x128xf32>
    %c0_3 = arith.constant 0 : index
    %c0_4 = arith.constant 0 : index
    %4 = vector.load %arg3[%c0_3, %c0_4] : memref<1x128xf32, #tpu.memory_space<vmem>>, vector<1x128xf32>
    %5 = vector.broadcast %4 : vector<1x128xf32> to vector<8x128xf32>
    %6 = arith.addf %3, %5 : vector<8x128xf32>
    %cst_5 = arith.constant 0.000000e+00 : f32
    %7 = vector.broadcast %cst_5 : f32 to vector<8x128xf32>
    %8 = arith.maximumf %6, %7 : vector<8x128xf32>
    %9 = arith.truncf %8 : vector<8x128xf32> to vector<8x128xbf16>
    %c0_6 = arith.constant 0 : index
    %c0_7 = arith.constant 0 : index
    %10 = vector.load %arg4[%c0_6, %c0_7] : memref<128x128xbf16, #tpu.memory_space<vmem>>, vector<128x128xbf16>
    %cst_8 = arith.constant dense<0.000000e+00> : vector<8x128xf32>
    %11 = tpu.matmul %9, %10, %cst_8 {dimension_numbers = #tpu.dot_dimension_numbers<[1], [0], [0], [1], [0, 0, 1, 1], [], []>} : vector<8x128xbf16>, vector<128x128xbf16>, vector<8x128xf32> -> vector<8x128xf32>
    %c0_9 = arith.constant 0 : index
    %c0_10 = arith.constant 0 : index
    %12 = vector.load %arg5[%c0_9, %c0_10] : memref<1x128xf32, #tpu.memory_space<vmem>>, vector<1x128xf32>
    %13 = vector.broadcast %12 : vector<1x128xf32> to vector<8x128xf32>
    %14 = arith.addf %11, %13 : vector<8x128xf32>
    %c0_11 = arith.constant 0 : index
    %c0_12 = arith.constant 0 : index
    %15 = vector.load %arg6[%c0_11, %c0_12] : memref<8x128xf32, #tpu.memory_space<vmem>>, vector<8x128xf32>
    tpu.vector_store %arg6[%c0_11, %c0_12], %14 {strides = array<i32>} : memref<8x128xf32, #tpu.memory_space<vmem>>, vector<8x128xf32>,
    return
  }
  func.func @transform_0(%arg0: i32) -> (i32, i32) {
    %c0_i32 = arith.constant 0 : i32
    %c0_i32_0 = arith.constant 0 : i32
    return %arg0, %c0_i32 : i32, i32
  }
  func.func @transform_1(%arg0: i32) -> (i32, i32) {
    %c0_i32 = arith.constant 0 : i32
    %c0_i32_0 = arith.constant 0 : i32
    %c0_i32_1 = arith.constant 0 : i32
    return %c0_i32, %c0_i32_0 : i32, i32
  }
  func.func @transform_2(%arg0: i32) -> (i32, i32) {
    %c0_i32 = arith.constant 0 : i32
    %c0_i32_0 = arith.constant 0 : i32
    %c0_i32_1 = arith.constant 0 : i32
    return %c0_i32, %c0_i32_0 : i32, i32
  }
  func.func @transform_3(%arg0: i32) -> (i32, i32) {
    %c0_i32 = arith.constant 0 : i32
    %c0_i32_0 = arith.constant 0 : i32
    %c0_i32_1 = arith.constant 0 : i32
    return %c0_i32, %c0_i32_0 : i32, i32
  }
  func.func @transform_4(%arg0: i32) -> (i32, i32) {
    %c0_i32 = arith.constant 0 : i32
    %c0_i32_0 = arith.constant 0 : i32
    %c0_i32_1 = arith.constant 0 : i32
    return %c0_i32, %c0_i32_0 : i32, i32
  }
  func.func @transform_5(%arg0: i32) -> (i32, i32) {
    %c0_i32 = arith.constant 0 : i32
    %c0_i32_0 = arith.constant 0 : i32
    return %arg0, %c0_i32 : i32, i32
  }
}

</mosaic_0001>

<llo_original>
// kernel: mlp_forward.1
$region0: #{mlp_forward.1}
  #allocation0 [shape = 'u32[]', space=smem, size = 0x4, offset = 0x4, fixed_abs, tag = 'smem constant byte address 0x4 - core index']
  #allocation1 [shape = 'u32[72,128]{1,0:T(1,128)}', space=vmem, size = 0x9000, scoped, tag = 'internal scratch']
  %s0 = inlined_call_operand.vmem [shape: f32[16,32], index: 0, kind: input, shape index: {}]
  %s1 = inlined_call_operand.vmem [shape: bf16[32,128], index: 1, kind: input, shape index: {}]
  %s2 = inlined_call_operand.vmem [shape: f32[1,128], index: 2, kind: input, shape index: {}]
  %s3 = inlined_call_operand.vmem [shape: bf16[128,128], index: 3, kind: input, shape index: {}]
  %s4 = inlined_call_operand.vmem [shape: f32[1,128], index: 4, kind: input, shape index: {}]
  %s5 = inlined_call_operand.vmem [shape: f32[16,128], index: 5, kind: output, shape index: {}]
  %s6 = sld [smem:[#allocation0]]
  $region53: #{mlp_forward.1} parent=0
    _
  %s8 = ssub.s32 1, %s6
  %s9 = scalar_select 0, %s8, %s6
  loop: start=0, step=1, limit=4
  $region2: #{mlp_forward.1} parent=0 // loop_pre_header
    _
  $region3: #{mlp_forward.1} parent=0 // loop_header
    %s11 = sphi 0, %s15
    %p12 = scmp.ge.s32.totalorder %s11, 4
    %s21 = sphi 0, %s23
    %s24 = sphi 0, %s21
    %s25 = sphi 0, %s24
    %s41 = sphi 0, %s25
    %s45 = sphi 0, %s45
    %s47 = sphi 0, %s45
    %s48 = sphi 0, %s47
    %s62 = sphi 0, %s48
    %s66 = sphi 0, %s66
    %s68 = sphi 0, %s66
    %s69 = sphi 0, %s68
    %s83 = sphi 0, %s69
    %s87 = sphi 0, %s87
    %s89 = sphi 0, %s87
    %s90 = sphi 0, %s89
    %s104 = sphi 0, %s90
    %s108 = sphi 0, %s108
    %s110 = sphi 0, %s108
    %s111 = sphi 0, %s110
    %s125 = sphi 0, %s111
    %s131 = sphi 0, %s133
    %s134 = sphi 0, %s131
    %s135 = sphi 0, %s134
    %s151 = sphi 0, %s135
  $region4: #{mlp_forward.1} parent=0 // loop_header_branch
    %14 = sbr.rel (%p12) target = $region8
  $region5: #{mlp_forward.1} parent=0 // loop_body
    %s16 = ssub.s32 %s11, 1
    %s17 = ssub.s32 %s11, 2
    %s18 = sadd.s32 %s11, 1
    %s19 = ssub.s32 %s11, %s18
    %p20 = scmp.eq.s32.totalorder %s19, 0
    %s22 = sadd.s32 %s21, 1
    %s23 = scalar_select %p20, %s21, %s22
    %p26 = pneg %p20
    %p27 = scmp.eq.s32.totalorder %s11, 1
    %p28 = por %p26, %p27
    %p29 = scmp.ne.s32.totalorder %s21, %s24
    %p30 = scmp.eq.s32.totalorder %s11, 0
    %p31 = por %p29, %p30
    %p32 = scmp.ne.s32.totalorder %s21, %s24
    %p33 = scmp.eq.s32.totalorder %s16, 1
    %p34 = por %p32, %p33
    %p35 = scmp.ne.s32.totalorder %s24, %s25
    %p36 = scmp.eq.s32.totalorder %s16, 0
    %p37 = por %p35, %p36
    %p38 = scmp.ne.s32.totalorder %s24, %s25
    %p39 = scmp.eq.s32.totalorder %s17, 1
    %p40 = por %p38, %p39
    %p42 = scmp.ne.s32.totalorder %s25, %s41
    %p43 = scmp.eq.s32.totalorder %s17, 0
    %p44 = por %p42, %p43
    %s46 = sadd.s32 %s45, 1
    %p49 = scmp.eq.s32.totalorder %s11, 1
    %p50 = scmp.ne.s32.totalorder %s45, %s47
    %p51 = scmp.eq.s32.totalorder %s11, 0
    %p52 = por %p50, %p51
    %p53 = scmp.ne.s32.totalorder %s45, %s47
    %p54 = scmp.eq.s32.totalorder %s16, 1
    %p55 = por %p53, %p54
    %p56 = scmp.ne.s32.totalorder %s47, %s48
    %p57 = scmp.eq.s32.totalorder %s16, 0
    %p58 = por %p56, %p57
    %p59 = scmp.ne.s32.totalorder %s47, %s48
    %p60 = scmp.eq.s32.totalorder %s17, 1
    %p61 = por %p59, %p60
    %p63 = scmp.ne.s32.totalorder %s48, %s62
    %p64 = scmp.eq.s32.totalorder %s17, 0
    %p65 = por %p63, %p64
    %s67 = sadd.s32 %s66, 1
    %p70 = scmp.eq.s32.totalorder %s11, 1
    %p71 = scmp.ne.s32.totalorder %s66, %s68
    %p72 = scmp.eq.s32.totalorder %s11, 0
    %p73 = por %p71, %p72
    %p74 = scmp.ne.s32.totalorder %s66, %s68
    %p75 = scmp.eq.s32.totalorder %s16, 1
    %p76 = por %p74, %p75
    %p77 = scmp.ne.s32.totalorder %s68, %s69
    %p78 = scmp.eq.s32.totalorder %s16, 0
    %p79 = por %p77, %p78
    %p80 = scmp.ne.s32.totalorder %s68, %s69
    %p81 = scmp.eq.s32.totalorder %s17, 1
    %p82 = por %p80, %p81
    %p84 = scmp.ne.s32.totalorder %s69, %s83
    %p85 = scmp.eq.s32.totalorder %s17, 0
    %p86 = por %p84, %p85
    %s88 = sadd.s32 %s87, 1
    %p91 = scmp.eq.s32.totalorder %s11, 1
    %p92 = scmp.ne.s32.totalorder %s87, %s89
    %p93 = scmp.eq.s32.totalorder %s11, 0
    %p94 = por %p92, %p93
    %p95 = scmp.ne.s32.totalorder %s87, %s89
    %p96 = scmp.eq.s32.totalorder %s16, 1
    %p97 = por %p95, %p96
    %p98 = scmp.ne.s32.totalorder %s89, %s90
    %p99 = scmp.eq.s32.totalorder %s16, 0
    %p100 = por %p98, %p99
    %p101 = scmp.ne.s32.totalorder %s89, %s90
    %p102 = scmp.eq.s32.totalorder %s17, 1
    %p103 = por %p101, %p102
    %p105 = scmp.ne.s32.totalorder %s90, %s104
    %p106 = scmp.eq.s32.totalorder %s17, 0
    %p107 = por %p105, %p106
    %s109 = sadd.s32 %s108, 1
    %p112 = scmp.eq.s32.totalorder %s11, 1
    %p113 = scmp.ne.s32.totalorder %s108, %s110
    %p114 = scmp.eq.s32.totalorder %s11, 0
    %p115 = por %p113, %p114
    %p116 = scmp.ne.s32.totalorder %s108, %s110
    %p117 = scmp.eq.s32.totalorder %s16, 1
    %p118 = por %p116, %p117
    %p119 = scmp.ne.s32.totalorder %s110, %s111
    %p120 = scmp.eq.s32.totalorder %s16, 0
    %p121 = por %p119, %p120
    %p122 = scmp.ne.s32.totalorder %s110, %s111
    %p123 = scmp.eq.s32.totalorder %s17, 1
    %p124 = por %p122, %p123
    %p126 = scmp.ne.s32.totalorder %s111, %s125
    %p127 = scmp.eq.s32.totalorder %s17, 0
    %p128 = por %p126, %p127
    %s129 = ssub.s32 %s11, %s18
    %p130 = scmp.eq.s32.totalorder %s129, 0
    %s132 = sadd.s32 %s131, 1
    %s133 = scalar_select %p130, %s131, %s132
    %p136 = pneg %p130
    %p137 = scmp.eq.s32.totalorder %s11, 1
    %p138 = por %p136, %p137
    %p139 = scmp.ne.s32.totalorder %s131, %s134
    %p140 = scmp.eq.s32.totalorder %s11, 0
    %p141 = por %p139, %p140
    %p142 = scmp.ne.s32.totalorder %s131, %s134
    %p143 = scmp.eq.s32.totalorder %s16, 1
    %p144 = por %p142, %p143
    %p145 = scmp.ne.s32.totalorder %s134, %s135
    %p146 = scmp.eq.s32.totalorder %s16, 0
    %p147 = por %p145, %p146
    %p148 = scmp.ne.s32.totalorder %s134, %s135
    %p149 = scmp.eq.s32.totalorder %s17, 1
    %p150 = por %p148, %p149
    %p152 = scmp.ne.s32.totalorder %s135, %s151
    %p153 = scmp.eq.s32.totalorder %s17, 0
    %p154 = por %p152, %p153
    %p155 = scmp.le.s32.totalorder 1, %s11
    %p156 = scmp.lt.s32.totalorder %s11, 3
    %p157 = pnand %p155, %p156
    %p158 = pneg %p157
    // Predicated region
    $region9: #{mlp_forward.1} parent=5 // pred_check
      _
    $region10: #{mlp_forward.1} parent=5 // pred_check_branch
      %160 = sbr.rel (%p157) target = $region12
    $region11: #{mlp_forward.1} parent=5 // pred_region
      %s161 = ssub.s32 %s11, 1
      // Predicated region
      $region13: #{mlp_forward.1} parent=11 // pred_check
        %p162 = pneg %p58
      $region14: #{mlp_forward.1} parent=11 // pred_check_branch
        %164 = sbr.rel (%p162) target = $region16
      $region15: #{mlp_forward.1} parent=11 // pred_region
        _
      $region16: #{mlp_forward.1} parent=11 // pred_fallthru
        _
      // Predicated region
      $region17: #{mlp_forward.1} parent=11 // pred_check
        %p165 = pneg %p79
      $region18: #{mlp_forward.1} parent=11 // pred_check_branch
        %167 = sbr.rel (%p165) target = $region20
      $region19: #{mlp_forward.1} parent=11 // pred_region
        _
      $region20: #{mlp_forward.1} parent=11 // pred_fallthru
        _
      // Predicated region
      $region21: #{mlp_forward.1} parent=11 // pred_check
        %p168 = pneg %p100
      $region22: #{mlp_forward.1} parent=11 // pred_check_branch
        %170 = sbr.rel (%p168) target = $region24
      $region23: #{mlp_forward.1} parent=11 // pred_region
        _
      $region24: #{mlp_forward.1} parent=11 // pred_fallthru
        _
      // Predicated region
      $region25: #{mlp_forward.1} parent=11 // pred_check
        %p171 = pneg %p121
      $region26: #{mlp_forward.1} parent=11 // pred_check_branch
        %173 = sbr.rel (%p171) target = $region28
      $region27: #{mlp_forward.1} parent=11 // pred_region
        _
      $region28: #{mlp_forward.1} parent=11 // pred_fallthru
        _
    $region12: #{mlp_forward.1} parent=5 // pred_fallthru
      _
    %p174 = scmp.lt.s32.totalorder %s11, 2
    // Predicated region
    $region29: #{mlp_forward.1} parent=5 // pred_check
      %p175 = pneg %p174
    $region30: #{mlp_forward.1} parent=5 // pred_check_branch
      %177 = sbr.rel (%p175) target = $region32
    $region31: #{mlp_forward.1} parent=5 // pred_region
      // Predicated region
      $region33: #{mlp_forward.1} parent=31 // pred_check
        %p178 = pneg %p31
      $region34: #{mlp_forward.1} parent=31 // pred_check_branch
        %180 = sbr.rel (%p178) target = $region36
      $region35: #{mlp_forward.1} parent=31 // pred_region
        %p181 = scmp.lt.s32.totalorder %s11, 1
        %s182 = scalar_select %p181, %s11, 1
        %s183 = smul.addr %s182, 8
        %s184 = scalar_lea.vmem %s0, %s183
      $region36: #{mlp_forward.1} parent=31 // pred_fallthru
        _
    $region32: #{mlp_forward.1} parent=5 // pred_fallthru
      _
    %p185 = scmp.le.s32.totalorder 1, %s11
    %p186 = scmp.lt.s32.totalorder %s11, 3
    %p187 = pnand %p185, %p186
    %p188 = pneg %p187
    // Predicated region
    $region37: #{mlp_forward.1} parent=5 // pred_check
      _
    $region38: #{mlp_forward.1} parent=5 // pred_check_branch
      %190 = sbr.rel (%p187) target = $region40
    $region39: #{mlp_forward.1} parent=5 // pred_region
      %s191 = ssub.s32 %s11, 1
      %p192 = scmp.lt.s32.totalorder %s16, 1
      %s193 = scalar_select %p192, %s16, 1
      %s194 = smul.addr %s193, 8
      %s195 = scalar_lea.vmem %s0, %s194
      %p196 = pneg %p37
      %p197 = pneg %p34
      %p198 = pneg %p58
      %p199 = pneg %p55
      %p200 = pneg %p79
      %p201 = pneg %p76
      %p202 = pneg %p100
      %p203 = pneg %p97
      %p204 = pneg %p121
      %p205 = pneg %p118
      %p206 = pneg %p147
      %p207 = pneg %p144
      %p208 = scmp.lt.s32.totalorder %s16, 1
      %s209 = scalar_select %p208, %s16, 1
      %s210 = smul.addr %s209, 8
      %s211 = scalar_lea.vmem %s5, %s210
      %p212 = scmp.lt.s32.totalorder %s16, 1
      %s213 = scalar_select %p212, %s16, 1
      %s214 = smul.addr %s213, 8
      %s215 = scalar_lea.vmem %s0, %s214
      %p216 = scmp.lt.s32.totalorder %s16, 1
      %s217 = scalar_select %p216, %s16, 1
      %s218 = smul.addr %s217, 8
      %s219 = scalar_lea.vmem %s5, %s218
      %v221 = vld [vmem:[%s215] sm:$0xff]
      %v222 = vpack.c.bf16 %v221, %v221
      %v223 = vld [vmem:[%s1] sm:$0xf]
      %v224 = vld [vmem:[%s1 + $0x4] sm:$0xf]
      %v225 = vld [vmem:[%s1 + $0x8] sm:$0xf]
      %v226 = vld [vmem:[%s1 + $0xc] sm:$0xf]
      %v227 = vld [vmem:[%s2] sm:$0x1]
      %v229 = vperm.slane %v227, 0
      %v235 = vunpack.c.l.b16 %v223
      %v236 = vunpack.c.l.b16 %v224
      %v237 = vunpack.c.l.b16 %v225
      %v238 = vunpack.c.l.b16 %v226
      %v239 = vpack.c.b16 %v236, %v235
      %v240 = vpack.c.b16 %v238, %v237
      %vm243 = vcmask 261120
      %v245 = vsel %vm243, %v222, 0
      %247 = vmatpush.bf16.msra.mxu0 0
      %248 = vmatpush.bf16.msra.mxu0 0
      %249 = vmatpush.bf16.msra.mxu0 0
      %250 = vmatpush.bf16.msra.mxu0 0
      %251 = vmatpush.bf16.msra.mxu0 0
      %252 = vmatpush.bf16.msra.mxu0 0
      %253 = vmatpush.bf16.msra.mxu0 %v240
      %254 = vmatpush.bf16.msra.mxu0 %v239
      %255 = vmatmul.bf16.gmra.mxu0 %v245
      %v256 = vpop.f32.mrf.mxu0
      %v257 = vadd.f32 %v229, %v256
      %v258 = vpop.f32.mrf.mxu0
      %259 = vdwg.mxu0
      %v260 = vmax.f32 %v257, 0.0
      %v261 = vpack.c.bf16 %v260, %v260
      %v262 = vld [vmem:[%s3] sm:$0xf]
      %v263 = vld [vmem:[%s3 + $0x4] sm:$0xf]
      %v264 = vld [vmem:[%s3 + $0x8] sm:$0xf]
      %v265 = vld [vmem:[%s3 + $0xc] sm:$0xf]
      %v266 = vld [vmem:[%s3 + $0x10] sm:$0xf]
      %v267 = vld [vmem:[%s3 + $0x14] sm:$0xf]
      %v268 = vld [vmem:[%s3 + $0x18] sm:$0xf]
      %v269 = vld [vmem:[%s3 + $0x1c] sm:$0xf]
      %v270 = vld [vmem:[%s3 + $0x20] sm:$0xf]
      %v271 = vld [vmem:[%s3 + $0x24] sm:$0xf]
      %v272 = vld [vmem:[%s3 + $0x28] sm:$0xf]
      %v273 = vld [vmem:[%s3 + $0x2c] sm:$0xf]
      %v274 = vld [vmem:[%s3 + $0x30] sm:$0xf]
      %v275 = vld [vmem:[%s3 + $0x34] sm:$0xf]
      %v276 = vld [vmem:[%s3 + $0x38] sm:$0xf]
      %v277 = vld [vmem:[%s3 + $0x3c] sm:$0xf]
      %v278 = vld [vmem:[%s4] sm:$0x1]
      %v280 = vperm.slane %v278, 0
      %v298 = vunpack.c.l.b16 %v262
      %v299 = vunpack.c.l.b16 %v263
      %v300 = vunpack.c.l.b16 %v264
      %v301 = vunpack.c.l.b16 %v265
      %v302 = vunpack.c.l.b16 %v266
      %v303 = vunpack.c.l.b16 %v267
      %v304 = vunpack.c.l.b16 %v268
      %v305 = vunpack.c.l.b16 %v269
      %v306 = vunpack.c.l.b16 %v270
      %v307 = vunpack.c.l.b16 %v271
      %v308 = vunpack.c.l.b16 %v272
      %v309 = vunpack.c.l.b16 %v273
      %v310 = vunpack.c.l.b16 %v274
      %v311 = vunpack.c.l.b16 %v275
      %v312 = vunpack.c.l.b16 %v276
      %v313 = vunpack.c.l.b16 %v277
      %v314 = vpack.c.b16 %v299, %v298
      %v315 = vpack.c.b16 %v301, %v300
      %v316 = vpack.c.b16 %v303, %v302
      %v317 = vpack.c.b16 %v305, %v304
      %v318 = vpack.c.b16 %v307, %v306
      %v319 = vpack.c.b16 %v309, %v308
      %v320 = vpack.c.b16 %v311, %v310
      %v321 = vpack.c.b16 %v313, %v312
      %330 = vmatpush.bf16.msra.mxu0 %v321
      %331 = vmatpush.bf16.msra.mxu0 %v320
      %332 = vmatpush.bf16.msra.mxu0 %v319
      %333 = vmatpush.bf16.msra.mxu0 %v318
      %334 = vmatpush.bf16.msra.mxu0 %v317
      %335 = vmatpush.bf16.msra.mxu0 %v316
      %336 = vmatpush.bf16.msra.mxu0 %v315
      %337 = vmatpush.bf16.msra.mxu0 %v314
      %338 = vmatmul.bf16.gmra.mxu0 %v261
      %v339 = vpop.f32.mrf.mxu0
      %v340 = vadd.f32 %v280, %v339
      %v341 = vpop.f32.mrf.mxu0
      %342 = vdwg.mxu0
      %343 = vst [vmem:[%s219] sm:$0xff] %v340
      %p344 = scmp.lt.s32.totalorder %s16, 1
      %s345 = scalar_select %p344, %s16, 1
      %s346 = smul.addr %s345, 8
      %s347 = scalar_lea.vmem %s5, %s346
      // Predicated region
      $region41: #{mlp_forward.1} parent=39 // pred_check
        %p348 = pneg %p144
      $region42: #{mlp_forward.1} parent=39 // pred_check_branch
        %350 = sbr.rel (%p348) target = $region44
      $region43: #{mlp_forward.1} parent=39 // pred_region
        _
      $region44: #{mlp_forward.1} parent=39 // pred_fallthru
        _
    $region40: #{mlp_forward.1} parent=5 // pred_fallthru
      _
    %p351 = scmp.le.s32.totalorder 2, %s11
    // Predicated region
    $region45: #{mlp_forward.1} parent=5 // pred_check
      %p352 = pneg %p351
    $region46: #{mlp_forward.1} parent=5 // pred_check_branch
      %354 = sbr.rel (%p352) target = $region48
    $region47: #{mlp_forward.1} parent=5 // pred_region
      %s355 = ssub.s32 %s11, 2
      // Predicated region
      $region49: #{mlp_forward.1} parent=47 // pred_check
        %p356 = pneg %p150
      $region50: #{mlp_forward.1} parent=47 // pred_check_branch
        %358 = sbr.rel (%p356) target = $region52
      $region51: #{mlp_forward.1} parent=47 // pred_region
        %p359 = scmp.lt.s32.totalorder %s17, 1
        %s360 = scalar_select %p359, %s17, 1
        %s361 = smul.addr %s360, 8
        %s362 = scalar_lea.vmem %s5, %s361
      $region52: #{mlp_forward.1} parent=47 // pred_fallthru
        _
    $region48: #{mlp_forward.1} parent=5 // pred_fallthru
      _
  $region6: #{mlp_forward.1} parent=0 // loop_footer
    %s15 = sadd.s32 1, %s11
  $region7: #{mlp_forward.1} parent=0 // loop_footer_branch
    %10 = sbr.rel target = $region3
  $region8: #{mlp_forward.1} parent=0 // loop_exit
    _

</llo_original>
